<compile_context>
chip_gen: v7x
topology: tpu7x:2x2x1
jax: 0.10.0
libtpu: 0.0.40
codegen_flags: <defaults>
</compile_context>

<pallas_src>
import functools
import math

import numpy as np
import jax
import jax.numpy as jnp
from jax.experimental import pallas as pl
from jax.experimental.pallas import tpu as pltpu

_TWO_PI = float(2.0 * np.pi)
_HALF_PI = float(0.5 * np.pi)


def _round_up(v, m):
    return (v + m - 1) // m * m


def _pick_fold(embed_dim, *, max_fold=16, target_lanes=512):
    """Scalars folded per output block row so the block width is a multiple of 128
    (lane-dense) and roughly `target_lanes` wide."""
    f_min = 128 // math.gcd(embed_dim, 128)
    if f_min > max_fold:
        return 1  # unusual embed_dim: fall back to unfolded (block width == full dim, still legal)
    f = f_min
    while 2 * f <= max_fold and f * embed_dim < target_lanes:
        f *= 2  # doubling preserves the multiple-of-128 property
    return f


def _pick_rows_per_tile(n_rows, row_lanes, fold, vmem_budget_bytes, *, max_scalars=2048):
    """Folded rows per grid step, sized against an explicit VMEM budget.

    Per folded row, double buffered:
      out tile: 2 * row_lanes * 4 B               (row_lanes is a multiple of 128 -> unpadded)
      x tile  : 2 * roundup(fold, 128) * 4 B      (lane padding of the narrow x block)
    Per-step overhead is already amortized around 512-2048 effective scalar rows,
    so cap there rather than chasing huge tiles.
    """
    per_row = 2 * row_lanes * 4 + 2 * _round_up(max(fold, 1), 128) * 4
    tn = max(8, (vmem_budget_bytes // per_row) // 8 * 8)
    tn = min(tn, max(8, _round_up(max(max_scalars // fold, 1), 8)))
    tn = min(tn, _round_up(max(n_rows, 1), 8))  # don't over-pad tiny inputs
    return tn


def _gfp_kernel(x_ref, w_ref, b_ref, o_ref, *, fold, group_width):
    # x_ref: (tn, fold)   w_ref, b_ref: (1, fold*group_width)   o_ref: (tn, fold*group_width)
    tn = x_ref.shape[0]
    x = x_ref[...]
    # Lane-dense broadcast of x: xb[r, f*group_width + j] = x[r, f].
    # (VPU/XLU lane-broadcast + one concat; cost hides under the EUP sin pass.)
    parts = [jnp.broadcast_to(x[:, f:f + 1], (tn, group_width)) for f in range(fold)]
    xb = parts[0] if fold == 1 else jnp.concatenate(parts, axis=-1)
    # One fused transcendental pass over the full-width slab:
    # sin half uses phase 0, cos half uses phase pi/2 (cos(t) = sin(t + pi/2)).
    o_ref[...] = jnp.sin(xb * w_ref[...] + b_ref[...]).astype(o_ref.dtype)


def gaussian_fourier_projection(x, W, *, out_dtype=jnp.float32,
                                vmem_budget_bytes=8 * 1024 * 1024):
    """x: any-shaped float array of time steps.  W: (embed_dim // 2,) fixed features."""
    orig_shape = x.shape
    half = W.shape[0]
    embed_dim = 2 * half

    x_flat = jnp.asarray(x, jnp.float32).reshape(-1)
    n = x_flat.shape[0]

    fold = _pick_fold(embed_dim)
    row_lanes = fold * embed_dim

    n_rows = max(1, -(-n // fold))
    tn = _pick_rows_per_tile(n_rows, row_lanes, fold, vmem_budget_bytes)
    n_rows_pad = _round_up(n_rows, tn)
    n_pad = n_rows_pad * fold
    if n_pad != n:
        x_flat = jnp.pad(x_flat, (0, n_pad - n))  # padding rows compute sin(bias), sliced off
    x2d = x_flat.reshape(n_rows_pad, fold)

    # Fused weights / phase bias, pre-scaled once in the wrapper and tiled across folds.
    w_cat = (jnp.concatenate([W, W]).astype(jnp.float32)) * _TWO_PI            # (embed_dim,)
    b_cat = jnp.concatenate([jnp.zeros((half,), jnp.float32),
                             jnp.full((half,), _HALF_PI, jnp.float32)])        # (embed_dim,)
    w_row = jnp.tile(w_cat, fold).reshape(1, row_lanes)
    b_row = jnp.tile(b_cat, fold).reshape(1, row_lanes)

    grid = (n_rows_pad // tn,)

    # EUP (sin) is the saturating unit; HBM writeback is the secondary ceiling.
    cost = pl.CostEstimate(
        flops=2 * n_pad * embed_dim,             # one multiply + one bias add per output element
        transcendentals=n_pad * embed_dim,       # one sin per output element
        bytes_accessed=4 * (n_pad * (1 + embed_dim) + 2 * row_lanes),
    )

    kernel = functools.partial(_gfp_kernel, fold=fold, group_width=embed_dim)

    out = pl.pallas_call(
        kernel,
        out_shape=jax.ShapeDtypeStruct((n_rows_pad, row_lanes), out_dtype),
        grid=grid,
        in_specs=[
            pl.BlockSpec((tn, fold), lambda i: (i, 0)),          # folded row tile of x
            pl.BlockSpec((1, row_lanes), lambda i: (0, 0)),      # tiled 2*pi*[W,W] (resident, tiny)
            pl.BlockSpec((1, row_lanes), lambda i: (0, 0)),      # tiled phase bias [0, pi/2]
        ],
        out_specs=pl.BlockSpec((tn, row_lanes), lambda i: (i, 0)),
        compiler_params=pltpu.CompilerParams(
            dimension_semantics=("parallel",),                   # rows shard across v7x's 2 TCs
            vmem_limit_bytes=32 * 1024 * 1024,                   # explicit; tiles sized well below
        ),
        cost_estimate=cost,
    )(x2d, w_row, b_row)

    # Un-fold: row-major (n_rows_pad, fold*embed_dim) is byte-identical to (n_pad, embed_dim).
    out = out.reshape(n_pad, embed_dim)
    if n_pad != n:
        out = out[:n]
    return out.reshape(*orig_shape, embed_dim)


if __name__ == "__main__":
    key = jax.random.PRNGKey(0)
    k_w, k_x = jax.random.split(key)

    embed_dim = 64
    scale = 30.0
    # nn.Parameter(torch.randn(embed_dim // 2) * scale) -- deterministic synthetic init.
    W = jax.random.normal(k_w, (embed_dim // 2,), dtype=jnp.float32) * scale

    # Time-step-like inputs ('...' shapes): a small batch of scalars, a ragged 2-D batch
    # (exercises padding), and a larger batch (exercises a multi-step, megacore-split grid).
    for idx, shape in enumerate([(8,), (3, 50), (4096,)]):
        x = jax.random.uniform(jax.random.fold_in(k_x, idx), shape, dtype=jnp.float32)

        out = jax.block_until_ready(gaussian_fourier_projection(x, W))
        assert out.shape == shape + (embed_dim,), out.shape

        # float64 ground-truth reference.  With scale=30 the sin/cos arguments are O(500),
        # so 1-2 ULP f32 argument rounding (multiply association / sin lowering) moves the
        # O(1) result by ~1e-4; tolerances are set accordingly.
        x64 = np.asarray(x, np.float64)
        W64 = np.asarray(W, np.float64)
        proj = x64[..., None] * W64 * 2.0 * np.pi
        ref = np.concatenate([np.sin(proj), np.cos(proj)], axis=-1)
        np.testing.assert_allclose(np.asarray(out), ref, rtol=1e-3, atol=2e-3)

    print("KERNEL_OK")
</pallas_src>

<mosaic_0001>
module attributes {stable_mosaic.version = 11 : i64} {
  func.func @_gfp_kernel(%arg0: i32, %arg1: memref<8x8xf32, #tpu.memory_space<vmem>>, %arg2: memref<1x512xf32, #tpu.memory_space<vmem>>, %arg3: memref<1x512xf32, #tpu.memory_space<vmem>>, %arg4: memref<8x512xf32, #tpu.memory_space<vmem>>) attributes {dimension_semantics = [#tpu.dimension_semantics<parallel>], iteration_bounds = array<i64: 1>, scalar_prefetch = 0 : i64, scratch_operands = 0 : i64, tpu.core_type = #tpu.core_type<tc>, window_params = [{transform_indices = @transform_0, window_bounds = array<i64: 8, 8>}, {pipeline_mode = #tpu.pipeline_mode<synchronous>, transform_indices = @transform_1, window_bounds = array<i64: 1, 512>}, {pipeline_mode = #tpu.pipeline_mode<synchronous>, transform_indices = @transform_2, window_bounds = array<i64: 1, 512>}, {transform_indices = @transform_3, window_bounds = array<i64: 8, 512>}]} {
    %c0 = arith.constant 0 : index
    %c0_0 = arith.constant 0 : index
    %0 = vector.load %arg1[%c0, %c0_0] : memref<8x8xf32, #tpu.memory_space<vmem>>, vector<8x8xf32>
    %1 = vector.extract_strided_slice %0 {offsets = [0, 0], sizes = [8, 1], strides = [1, 1]} : vector<8x8xf32> to vector<8x1xf32>
    %2 = vector.shape_cast %1 : vector<8x1xf32> to vector<8x1xf32>
    %3 = vector.broadcast %2 : vector<8x1xf32> to vector<8x64xf32>
    %4 = vector.extract_strided_slice %0 {offsets = [0, 1], sizes = [8, 1], strides = [1, 1]} : vector<8x8xf32> to vector<8x1xf32>
    %5 = vector.shape_cast %4 : vector<8x1xf32> to vector<8x1xf32>
    %6 = vector.broadcast %5 : vector<8x1xf32> to vector<8x64xf32>
    %7 = vector.extract_strided_slice %0 {offsets = [0, 2], sizes = [8, 1], strides = [1, 1]} : vector<8x8xf32> to vector<8x1xf32>
    %8 = vector.shape_cast %7 : vector<8x1xf32> to vector<8x1xf32>
    %9 = vector.broadcast %8 : vector<8x1xf32> to vector<8x64xf32>
    %10 = vector.extract_strided_slice %0 {offsets = [0, 3], sizes = [8, 1], strides = [1, 1]} : vector<8x8xf32> to vector<8x1xf32>
    %11 = vector.shape_cast %10 : vector<8x1xf32> to vector<8x1xf32>
    %12 = vector.broadcast %11 : vector<8x1xf32> to vector<8x64xf32>
    %13 = vector.extract_strided_slice %0 {offsets = [0, 4], sizes = [8, 1], strides = [1, 1]} : vector<8x8xf32> to vector<8x1xf32>
    %14 = vector.shape_cast %13 : vector<8x1xf32> to vector<8x1xf32>
    %15 = vector.broadcast %14 : vector<8x1xf32> to vector<8x64xf32>
    %16 = vector.extract_strided_slice %0 {offsets = [0, 5], sizes = [8, 1], strides = [1, 1]} : vector<8x8xf32> to vector<8x1xf32>
    %17 = vector.shape_cast %16 : vector<8x1xf32> to vector<8x1xf32>
    %18 = vector.broadcast %17 : vector<8x1xf32> to vector<8x64xf32>
    %19 = vector.extract_strided_slice %0 {offsets = [0, 6], sizes = [8, 1], strides = [1, 1]} : vector<8x8xf32> to vector<8x1xf32>
    %20 = vector.shape_cast %19 : vector<8x1xf32> to vector<8x1xf32>
    %21 = vector.broadcast %20 : vector<8x1xf32> to vector<8x64xf32>
    %22 = vector.extract_strided_slice %0 {offsets = [0, 7], sizes = [8, 1], strides = [1, 1]} : vector<8x8xf32> to vector<8x1xf32>
    %23 = vector.shape_cast %22 : vector<8x1xf32> to vector<8x1xf32>
    %24 = vector.broadcast %23 : vector<8x1xf32> to vector<8x64xf32>
    %25 = tpu.concatenate %3, %6, %9, %12, %15, %18, %21, %24 in 1 : vector<8x64xf32>, vector<8x64xf32>, vector<8x64xf32>, vector<8x64xf32>, vector<8x64xf32>, vector<8x64xf32>, vector<8x64xf32>, vector<8x64xf32> -> vector<8x512xf32>
    %c0_1 = arith.constant 0 : index
    %c0_2 = arith.constant 0 : index
    %26 = vector.load %arg2[%c0_1, %c0_2] : memref<1x512xf32, #tpu.memory_space<vmem>>, vector<1x512xf32>
    %27 = vector.broadcast %26 : vector<1x512xf32> to vector<8x512xf32>
    %28 = arith.mulf %25, %27 : vector<8x512xf32>
    %c0_3 = arith.constant 0 : index
    %c0_4 = arith.constant 0 : index
    %29 = vector.load %arg3[%c0_3, %c0_4] : memref<1x512xf32, #tpu.memory_space<vmem>>, vector<1x512xf32>
    %30 = vector.broadcast %29 : vector<1x512xf32> to vector<8x512xf32>
    %31 = arith.addf %28, %30 : vector<8x512xf32>
    %32 = math.sin %31 : vector<8x512xf32>
    %c0_5 = arith.constant 0 : index
    %c0_6 = arith.constant 0 : index
    %33 = vector.load %arg4[%c0_5, %c0_6] : memref<8x512xf32, #tpu.memory_space<vmem>>, vector<8x512xf32>
    tpu.vector_store %arg4[%c0_5, %c0_6], %32 {strides = array<i32>} : memref<8x512xf32, #tpu.memory_space<vmem>>, vector<8x512xf32>,
    return
  }
  func.func @transform_0(%arg0: i32) -> (i32, i32) {
    %c0_i32 = arith.constant 0 : i32
    %c0_i32_0 = arith.constant 0 : i32
    return %arg0, %c0_i32 : i32, i32
  }
  func.func @transform_1(%arg0: i32) -> (i32, i32) {
    %c0_i32 = arith.constant 0 : i32
    %c0_i32_0 = arith.constant 0 : i32
    %c0_i32_1 = arith.constant 0 : i32
    return %c0_i32, %c0_i32_0 : i32, i32
  }
  func.func @transform_2(%arg0: i32) -> (i32, i32) {
    %c0_i32 = arith.constant 0 : i32
    %c0_i32_0 = arith.constant 0 : i32
    %c0_i32_1 = arith.constant 0 : i32
    return %c0_i32, %c0_i32_0 : i32, i32
  }
  func.func @transform_3(%arg0: i32) -> (i32, i32) {
    %c0_i32 = arith.constant 0 : i32
    %c0_i32_0 = arith.constant 0 : i32
    return %arg0, %c0_i32 : i32, i32
  }
}

</mosaic_0001>

<llo_original>
// kernel: tpu_custom_call.1
$region0: #{tpu_custom_call.1}
  #allocation0 [shape = 'u32[]', space=smem, size = 0x4, offset = 0x4, fixed_abs, tag = 'smem constant byte address 0x4 - core index']
  #allocation1 [shape = 'u32[144,128]{1,0:T(1,128)}', space=vmem, size = 0x12000, scoped, tag = 'internal scratch']
  %s0 = inlined_call_operand.hbm [shape: f32[8,8], index: 0, kind: input, shape index: {}]
  %s1 = inlined_call_operand.hbm [shape: f32[1,512], index: 1, kind: input, shape index: {}]
  %s2 = inlined_call_operand.vmem [shape: f32[1,512], index: 2, kind: input, shape index: {}]
  %s3 = inlined_call_operand.hbm [shape: f32[8,512], index: 3, kind: output, shape index: {}]
  %s4 = sld [smem:[#allocation0]]
  $region30: #{tpu_custom_call.1} parent=0
    _
  %s6 = ssub.s32 1, %s4
  %s7 = scalar_select 0, %s6, %s4
  $region1: #{tpu_custom_call.1} parent=0
    #allocation2 [shape = 'u8[4096]{0}', space=vmem, size = 0x1000, scoped, tag = 'input window, operand 0, single buffered']
    #allocation3 [shape = 's32[1]{0}', space=sflag, size = 0x4, scoped, tag = 'scoped memory for tpu_custom_call.1']
    #allocation4 [shape = 's32[1]{0}', space=sflag, size = 0x4, scoped, tag = 'scoped memory for tpu_custom_call.1']
    #allocation5 [shape = 'u8[2048]{0}', space=vmem, size = 0x800, scoped, tag = 'input window, operand 1, single buffered']
    #allocation6 [shape = 's32[1]{0}', space=sflag, size = 0x4, scoped, tag = 'scoped memory for tpu_custom_call.1']
    #allocation7 [shape = 'u8[16384]{0}', space=vmem, size = 0x4000, scoped, tag = 'output window, operand 0, single buffered']
    %8 = vsyncpa [#allocation3], 0
    %9 = vsyncpa [#allocation6], 0
    %10 = vsyncpa [#allocation4], 0
    // Predicated region
    $region2: #{tpu_custom_call.1} parent=1 // pred_check
      _
    $region3: #{tpu_custom_call.1} parent=1 // pred_check_branch
      %12 = sbr.rel (0) target = $region5
    $region4: #{tpu_custom_call.1} parent=1 // pred_region
      %s14 = ssub.s32 128, 128
      %15 = vsyncadd [#allocation3], %s14
      %s17 = sshll.u32 [#allocation2], 4
      %s18 = int_to_ptr.vmem [resolvable:$true] %s17
      %20 = dma.hbm_to_vmem [thread:$0]  %s0, 128, %s18, [#allocation3]
    $region5: #{tpu_custom_call.1} parent=1 // pred_fallthru
      _
    // Predicated region
    $region6: #{tpu_custom_call.1} parent=1 // pred_check
      _
    $region7: #{tpu_custom_call.1} parent=1 // pred_check_branch
      %22 = sbr.rel (0) target = $region9
    $region8: #{tpu_custom_call.1} parent=1 // pred_region
      %s24 = ssub.s32 64, 64
      %25 = vsyncadd [#allocation6], %s24
      %s27 = sshll.u32 [#allocation5], 4
      %s28 = int_to_ptr.vmem [resolvable:$true] %s27
      %30 = dma.hbm_to_vmem [thread:$0]  %s1, 64, %s28, [#allocation6]
    $region9: #{tpu_custom_call.1} parent=1 // pred_fallthru
      _
    // Predicated region
    $region10: #{tpu_custom_call.1} parent=1 // pred_check
      _
    $region11: #{tpu_custom_call.1} parent=1 // pred_check_branch
      %32 = sbr.rel (0) target = $region13
    $region12: #{tpu_custom_call.1} parent=1 // pred_region
      _
    $region13: #{tpu_custom_call.1} parent=1 // pred_fallthru
      _
    // Predicated region
    $region14: #{tpu_custom_call.1} parent=1 // pred_check
      _
    $region15: #{tpu_custom_call.1} parent=1 // pred_check_branch
      %34 = sbr.rel (0) target = $region17
    $region16: #{tpu_custom_call.1} parent=1 // pred_region
      %35 = dma.done [#allocation3], 128
    $region17: #{tpu_custom_call.1} parent=1 // pred_fallthru
      _
    // Predicated region
    $region18: #{tpu_custom_call.1} parent=1 // pred_check
      _
    $region19: #{tpu_custom_call.1} parent=1 // pred_check_branch
      %37 = sbr.rel (0) target = $region21
    $region20: #{tpu_custom_call.1} parent=1 // pred_region
      %38 = dma.done [#allocation6], 64
    $region21: #{tpu_custom_call.1} parent=1 // pred_fallthru
      _
    %v39 = vld [vmem:[#allocation2] sm:$0xff]
    %41 = vset.pattern.permute.xlu0 0
    %42 = vperm.xlu0 %41, %v39
    %v43 = vpop.permute.xlu0 %42
    %45 = vset.pattern.permute.xlu0 1
    %46 = vperm.xlu0 %45, %v39
    %v47 = vpop.permute.xlu0 %46
    %49 = vset.pattern.permute.xlu0 2
    %50 = vperm.xlu0 %49, %v39
    %v51 = vpop.permute.xlu0 %50
    %53 = vset.pattern.permute.xlu0 3
    %54 = vperm.xlu0 %53, %v39
    %v55 = vpop.permute.xlu0 %54
    %57 = vset.pattern.permute.xlu0 4
    %58 = vperm.xlu0 %57, %v39
    %v59 = vpop.permute.xlu0 %58
    %61 = vset.pattern.permute.xlu0 5
    %62 = vperm.xlu0 %61, %v39
    %v63 = vpop.permute.xlu0 %62
    %65 = vset.pattern.permute.xlu0 6
    %66 = vperm.xlu0 %65, %v39
    %v67 = vpop.permute.xlu0 %66
    %69 = vset.pattern.permute.xlu0 7
    %70 = vperm.xlu0 %69, %v39
    %v71 = vpop.permute.xlu0 %70
    %vm73 = vcmask 523264
    %v74 = vsel %vm73, %v43, %v47
    %v75 = vsel %vm73, %v51, %v55
    %v76 = vsel %vm73, %v59, %v63
    %v77 = vsel %vm73, %v67, %v71
    %v78 = vld [vmem:[#allocation5] sm:$0xf]
    %v80 = vlaneseq
    %v81 = vshrl.u32 %v80, 7
    %v82 = vsub.s32 0, %v81
    %v83 = vrot.slane %v78, %v82
    %v84 = vlaneseq
    %v85 = vshrl.u32 %v84, 7
    %v86 = vsub.s32 1, %v85
    %v87 = vrot.slane %v78, %v86
    %v88 = vlaneseq
    %v89 = vshrl.u32 %v88, 7
    %v90 = vsub.s32 2, %v89
    %v91 = vrot.slane %v78, %v90
    %v92 = vlaneseq
    %v93 = vshrl.u32 %v92, 7
    %v94 = vsub.s32 3, %v93
    %v95 = vrot.slane %v78, %v94
    %v100 = vmul.f32 %v74, %v83
    %v101 = vmul.f32 %v75, %v87
    %v102 = vmul.f32 %v76, %v91
    %v103 = vmul.f32 %v77, %v95
    %v104 = vld [vmem:[%s2] sm:$0xf]
    %v106 = vlaneseq
    %v107 = vshrl.u32 %v106, 7
    %v108 = vsub.s32 0, %v107
    %v109 = vrot.slane %v104, %v108
    %v110 = vlaneseq
    %v111 = vshrl.u32 %v110, 7
    %v112 = vsub.s32 1, %v111
    %v113 = vrot.slane %v104, %v112
    %v114 = vlaneseq
    %v115 = vshrl.u32 %v114, 7
    %v116 = vsub.s32 2, %v115
    %v117 = vrot.slane %v104, %v116
    %v118 = vlaneseq
    %v119 = vshrl.u32 %v118, 7
    %v120 = vsub.s32 3, %v119
    %v121 = vrot.slane %v104, %v120
    %v126 = vadd.f32 %v100, %v109
    %v127 = vadd.f32 %v101, %v113
    %v128 = vadd.f32 %v102, %v117
    %v129 = vadd.f32 %v103, %v121
    %v130 = vand.u32 2147483647, %v126
    %vm131 = vcmp.le.f32.partialorder %v130, 0.7853982
    %vm132 = vcmp.lt.s32.totalorder %v126, 0
    %v133 = vand.u32 %v126, 2139095040
    %v134 = vshrl.u32 %v133, 23
    %v135 = vsub.s32 %v134, 127
    %v136 = vand.u32 2147483647, %v126
    %v137 = vand.u32 %v136, 8388607
    %v138 = vor.u32 %v137, 8388608
    %v139 = vsub.s32 0, %v138
    %v140 = vadd.s32 %v135, 1
    %vm141 = vcmp.gt.s32.totalorder %v140, 0
    %v142 = vsel %vm141, %v140, 0
    %v143 = vshrl.u32 %v142, 5
    %v144 = vand.u32 %v142, 31
    %v145 = vsub.s32 32, %v144
    %v146 = vshrl.u32 683565275, %v145
    %v147 = vshll.u32 683565275, %v144
    %v148 = vshrl.u32 2475754826, %v145
    %v149 = vor.u32 %v147, %v148
    %v150 = vshll.u32 2475754826, %v144
    %v151 = vshrl.u32 2131351028, %v145
    %v152 = vor.u32 %v150, %v151
    %v153 = vshll.u32 2131351028, %v144
    %v154 = vshrl.u32 2102212464, %v145
    %v155 = vor.u32 %v153, %v154
    %v156 = vshll.u32 2102212464, %v144
    %v157 = vshrl.u32 920167782, %v145
    %v158 = vor.u32 %v156, %v157
    %v159 = vshll.u32 920167782, %v144
    %v160 = vshrl.u32 1326507024, %v145
    %v161 = vor.u32 %v159, %v160
    %vm162 = vcmp.lt.s32.totalorder %v143, 1
    %vm163 = vcmp.lt.s32.totalorder %v143, 2
    %vm164 = vcmp.lt.s32.totalorder %v143, 3
    %vm165 = vcmp.lt.s32.totalorder %v143, 4
    %v166 = vsel %vm162, %v146, %v149
    %v167 = vsel %vm165, %v155, 2102212464
    %v168 = vsel %vm164, %v152, %v167
    %v169 = vsel %vm163, %v166, %v168
    %v170 = vsel %vm162, %v149, %v152
    %v171 = vsel %vm165, %v158, 920167782
    %v172 = vsel %vm164, %v155, %v171
    %v173 = vsel %vm163, %v170, %v172
    %v174 = vsel %vm162, %v152, %v155
    %v175 = vsel %vm165, %v161, 1326507024
    %v176 = vsel %vm164, %v158, %v175
    %v177 = vsel %vm163, %v174, %v176
    %v178 = vshll.u32 %v138, 8
    %v179 = vmul.u32.u64.compose %v178, %v177
    %v180 = vextract.low.u32 %v179
    %v181 = vextract.high.u32 %v179
    %v182 = vmul.u32.u64.compose %v178, %v173
    %v183 = vextract.low.u32 %v182
    %v184 = vextract.high.u32 %v182
    %v185 = vmul.u32 %v178, %v169
    %v186 = vadd.s32 %v181, %v183
    %vm187 = vc.u32 %v181, %v183
    %v188 = vadd.s32 %v184, 1
    %v189 = vsel %vm187, %v188, %v184
    %v190 = vadd.s32 %v185, %v189
    %v191 = vadd.s32 %v190, 536870912
    %v192 = vshrl.u32 %v191, 30
    %v193 = vshll.u32 %v192, 30
    %v194 = vsub.s32 %v190, %v193
    %vm195 = vcmp.lt.s32.totalorder %v194, 0
    %v196 = vsub.s32 0, %v194
    %v197 = vsel %vm195, %v196, %v194
    %v198 = vclz %v197
    %v199 = vsub.s32 %v198, 2
    %vm200 = vcmp.gt.s32.totalorder 0, %v199
    %v201 = vsel %vm200, 0, %v199
    %v202 = vsub.s32 32, %v201
    %v203 = vshll.u32 %v194, %v201
    %v204 = vshrl.u32 %v186, %v202
    %v205 = vor.u32 %v203, %v204
    %v206 = vsub.s32 4294967266, %v201
    %v207 = vadd.s32 %v206, 127
    %v208 = vshll.u32 %v207, 23
    %v209 = vor.u32 4788187, %v208
    %v210 = vand.u32 2147483647, %v209
    %v212 = vcvt.s32.f32 %v205
    %v213 = vmul.f32 %v212, %v210
    %v214 = vxor.u32 %v213, 2147483648
    %v215 = vsel %vm132, %v214, %v213
    %v216 = vsub.s32 4, %v192
    %v217 = vsel %vm132, %v216, %v192
    %v218 = vsel %vm131, %v126, %v215
    %v219 = vsel %vm131, 0, %v217
    %v220 = vcosq.f32.pop %v218
    %v221 = vsinq.f32.pop %v218
    %vm222 = vweird.f32 %v126
    %v223 = vadd.s32 %v219, 3
    %v224 = vand.u32 %v223, 3
    %vm225 = vcmp.lt.s32.totalorder %v224, 2
    %vm226 = vcmp.eq.s32.totalorder %v224, 0
    %v227 = vxor.u32 %v221, 2147483648
    %v228 = vsel %vm226, %v220, %v227
    %vm229 = vcmp.eq.s32.totalorder %v224, 2
    %v230 = vxor.u32 %v220, 2147483648
    %v231 = vsel %vm229, %v230, %v221
    %v232 = vsel %vm225, %v228, %v231
    %v233 = vsel %vm222, nan, %v232
    %v234 = vand.u32 2147483647, %v127
    %vm235 = vcmp.le.f32.partialorder %v234, 0.7853982
    %vm236 = vcmp.lt.s32.totalorder %v127, 0
    %v237 = vand.u32 %v127, 2139095040
    %v238 = vshrl.u32 %v237, 23
    %v239 = vsub.s32 %v238, 127
    %v240 = vand.u32 2147483647, %v127
    %v241 = vand.u32 %v240, 8388607
    %v242 = vor.u32 %v241, 8388608
    %v243 = vsub.s32 0, %v242
    %v244 = vadd.s32 %v239, 1
    %vm245 = vcmp.gt.s32.totalorder %v244, 0
    %v246 = vsel %vm245, %v244, 0
    %v247 = vshrl.u32 %v246, 5
    %v248 = vand.u32 %v246, 31
    %v249 = vsub.s32 32, %v248
    %v250 = vshrl.u32 683565275, %v249
    %v251 = vshll.u32 683565275, %v248
    %v252 = vshrl.u32 2475754826, %v249
    %v253 = vor.u32 %v251, %v252
    %v254 = vshll.u32 2475754826, %v248
    %v255 = vshrl.u32 2131351028, %v249
    %v256 = vor.u32 %v254, %v255
    %v257 = vshll.u32 2131351028, %v248
    %v258 = vshrl.u32 2102212464, %v249
    %v259 = vor.u32 %v257, %v258
    %v260 = vshll.u32 2102212464, %v248
    %v261 = vshrl.u32 920167782, %v249
    %v262 = vor.u32 %v260, %v261
    %v263 = vshll.u32 920167782, %v248
    %v264 = vshrl.u32 1326507024, %v249
    %v265 = vor.u32 %v263, %v264
    %vm266 = vcmp.lt.s32.totalorder %v247, 1
    %vm267 = vcmp.lt.s32.totalorder %v247, 2
    %vm268 = vcmp.lt.s32.totalorder %v247, 3
    %vm269 = vcmp.lt.s32.totalorder %v247, 4
    %v270 = vsel %vm266, %v250, %v253
    %v271 = vsel %vm269, %v259, 2102212464
    %v272 = vsel %vm268, %v256, %v271
    %v273 = vsel %vm267, %v270, %v272
    %v274 = vsel %vm266, %v253, %v256
    %v275 = vsel %vm269, %v262, 920167782
    %v276 = vsel %vm268, %v259, %v275
    %v277 = vsel %vm267, %v274, %v276
    %v278 = vsel %vm266, %v256, %v259
    %v279 = vsel %vm269, %v265, 1326507024
    %v280 = vsel %vm268, %v262, %v279
    %v281 = vsel %vm267, %v278, %v280
    %v282 = vshll.u32 %v242, 8
    %v283 = vmul.u32.u64.compose %v282, %v281
    %v284 = vextract.low.u32 %v283
    %v285 = vextract.high.u32 %v283
    %v286 = vmul.u32.u64.compose %v282, %v277
    %v287 = vextract.low.u32 %v286
    %v288 = vextract.high.u32 %v286
    %v289 = vmul.u32 %v282, %v273
    %v290 = vadd.s32 %v285, %v287
    %vm291 = vc.u32 %v285, %v287
    %v292 = vadd.s32 %v288, 1
    %v293 = vsel %vm291, %v292, %v288
    %v294 = vadd.s32 %v289, %v293
    %v295 = vadd.s32 %v294, 536870912
    %v296 = vshrl.u32 %v295, 30
    %v297 = vshll.u32 %v296, 30
    %v298 = vsub.s32 %v294, %v297
    %vm299 = vcmp.lt.s32.totalorder %v298, 0
    %v300 = vsub.s32 0, %v298
    %v301 = vsel %vm299, %v300, %v298
    %v302 = vclz %v301
    %v303 = vsub.s32 %v302, 2
    %vm304 = vcmp.gt.s32.totalorder 0, %v303
    %v305 = vsel %vm304, 0, %v303
    %v306 = vsub.s32 32, %v305
    %v307 = vshll.u32 %v298, %v305
    %v308 = vshrl.u32 %v290, %v306
    %v309 = vor.u32 %v307, %v308
    %v310 = vsub.s32 4294967266, %v305
    %v311 = vadd.s32 %v310, 127
    %v312 = vshll.u32 %v311, 23
    %v313 = vor.u32 4788187, %v312
    %v314 = vand.u32 2147483647, %v313
    %v316 = vcvt.s32.f32 %v309
    %v317 = vmul.f32 %v316, %v314
    %v318 = vxor.u32 %v317, 2147483648
    %v319 = vsel %vm236, %v318, %v317
    %v320 = vsub.s32 4, %v296
    %v321 = vsel %vm236, %v320, %v296
    %v322 = vsel %vm235, %v127, %v319
    %v323 = vsel %vm235, 0, %v321
    %v324 = vcosq.f32.pop %v322
    %v325 = vsinq.f32.pop %v322
    %vm326 = vweird.f32 %v127
    %v327 = vadd.s32 %v323, 3
    %v328 = vand.u32 %v327, 3
    %vm329 = vcmp.lt.s32.totalorder %v328, 2
    %vm330 = vcmp.eq.s32.totalorder %v328, 0
    %v331 = vxor.u32 %v325, 2147483648
    %v332 = vsel %vm330, %v324, %v331
    %vm333 = vcmp.eq.s32.totalorder %v328, 2
    %v334 = vxor.u32 %v324, 2147483648
    %v335 = vsel %vm333, %v334, %v325
    %v336 = vsel %vm329, %v332, %v335
    %v337 = vsel %vm326, nan, %v336
    %v338 = vand.u32 2147483647, %v128
    %vm339 = vcmp.le.f32.partialorder %v338, 0.7853982
    %vm340 = vcmp.lt.s32.totalorder %v128, 0
    %v341 = vand.u32 %v128, 2139095040
    %v342 = vshrl.u32 %v341, 23
    %v343 = vsub.s32 %v342, 127
    %v344 = vand.u32 2147483647, %v128
    %v345 = vand.u32 %v344, 8388607
    %v346 = vor.u32 %v345, 8388608
    %v347 = vsub.s32 0, %v346
    %v348 = vadd.s32 %v343, 1
    %vm349 = vcmp.gt.s32.totalorder %v348, 0
    %v350 = vsel %vm349, %v348, 0
    %v351 = vshrl.u32 %v350, 5
    %v352 = vand.u32 %v350, 31
    %v353 = vsub.s32 32, %v352
    %v354 = vshrl.u32 683565275, %v353
    %v355 = vshll.u32 683565275, %v352
    %v356 = vshrl.u32 2475754826, %v353
    %v357 = vor.u32 %v355, %v356
    %v358 = vshll.u32 2475754826, %v352
    %v359 = vshrl.u32 2131351028, %v353
    %v360 = vor.u32 %v358, %v359
    %v361 = vshll.u32 2131351028, %v352
    %v362 = vshrl.u32 2102212464, %v353
    %v363 = vor.u32 %v361, %v362
    %v364 = vshll.u32 2102212464, %v352
    %v365 = vshrl.u32 920167782, %v353
    %v366 = vor.u32 %v364, %v365
    %v367 = vshll.u32 920167782, %v352
    %v368 = vshrl.u32 1326507024, %v353
    %v369 = vor.u32 %v367, %v368
    %vm370 = vcmp.lt.s32.totalorder %v351, 1
    %vm371 = vcmp.lt.s32.totalorder %v351, 2
    %vm372 = vcmp.lt.s32.totalorder %v351, 3
    %vm373 = vcmp.lt.s32.totalorder %v351, 4
    %v374 = vsel %vm370, %v354, %v357
    %v375 = vsel %vm373, %v363, 2102212464
    %v376 = vsel %vm372, %v360, %v375
    %v377 = vsel %vm371, %v374, %v376
    %v378 = vsel %vm370, %v357, %v360
    %v379 = vsel %vm373, %v366, 920167782
    %v380 = vsel %vm372, %v363, %v379
    %v381 = vsel %vm371, %v378, %v380
    %v382 = vsel %vm370, %v360, %v363
    %v383 = vsel %vm373, %v369, 1326507024
    %v384 = vsel %vm372, %v366, %v383
    %v385 = vsel %vm371, %v382, %v384
    %v386 = vshll.u32 %v346, 8
    %v387 = vmul.u32.u64.compose %v386, %v385
    %v388 = vextract.low.u32 %v387
    %v389 = vextract.high.u32 %v387
    %v390 = vmul.u32.u64.compose %v386, %v381
    %v391 = vextract.low.u32 %v390
    %v392 = vextract.high.u32 %v390
    %v393 = vmul.u32 %v386, %v377
    %v394 = vadd.s32 %v389, %v391
    %vm395 = vc.u32 %v389, %v391
    %v396 = vadd.s32 %v392, 1
    %v397 = vsel %vm395, %v396, %v392
    %v398 = vadd.s32 %v393, %v397
    %v399 = vadd.s32 %v398, 536870912
    %v400 = vshrl.u32 %v399, 30
    %v401 = vshll.u32 %v400, 30
    %v402 = vsub.s32 %v398, %v401
    %vm403 = vcmp.lt.s32.totalorder %v402, 0
    %v404 = vsub.s32 0, %v402
    %v405 = vsel %vm403, %v404, %v402
    %v406 = vclz %v405
    %v407 = vsub.s32 %v406, 2
    %vm408 = vcmp.gt.s32.totalorder 0, %v407
    %v409 = vsel %vm408, 0, %v407
    %v410 = vsub.s32 32, %v409
    %v411 = vshll.u32 %v402, %v409
    %v412 = vshrl.u32 %v394, %v410
    %v413 = vor.u32 %v411, %v412
    %v414 = vsub.s32 4294967266, %v409
    %v415 = vadd.s32 %v414, 127
    %v416 = vshll.u32 %v415, 23
    %v417 = vor.u32 4788187, %v416
    %v418 = vand.u32 2147483647, %v417
    %v420 = vcvt.s32.f32 %v413
    %v421 = vmul.f32 %v420, %v418
    %v422 = vxor.u32 %v421, 2147483648
    %v423 = vsel %vm340, %v422, %v421
    %v424 = vsub.s32 4, %v400
    %v425 = vsel %vm340, %v424, %v400
    %v426 = vsel %vm339, %v128, %v423
    %v427 = vsel %vm339, 0, %v425
    %v428 = vcosq.f32.pop %v426
    %v429 = vsinq.f32.pop %v426
    %vm430 = vweird.f32 %v128
    %v431 = vadd.s32 %v427, 3
    %v432 = vand.u32 %v431, 3
    %vm433 = vcmp.lt.s32.totalorder %v432, 2
    %vm434 = vcmp.eq.s32.totalorder %v432, 0
    %v435 = vxor.u32 %v429, 2147483648
    %v436 = vsel %vm434, %v428, %v435
    %vm437 = vcmp.eq.s32.totalorder %v432, 2
    %v438 = vxor.u32 %v428, 2147483648
    %v439 = vsel %vm437, %v438, %v429
    %v440 = vsel %vm433, %v436, %v439
    %v441 = vsel %vm430, nan, %v440
    %v442 = vand.u32 2147483647, %v129
    %vm443 = vcmp.le.f32.partialorder %v442, 0.7853982
    %vm444 = vcmp.lt.s32.totalorder %v129, 0
    %v445 = vand.u32 %v129, 2139095040
    %v446 = vshrl.u32 %v445, 23
    %v447 = vsub.s32 %v446, 127
    %v448 = vand.u32 2147483647, %v129
    %v449 = vand.u32 %v448, 8388607
    %v450 = vor.u32 %v449, 8388608
    %v451 = vsub.s32 0, %v450
    %v452 = vadd.s32 %v447, 1
    %vm453 = vcmp.gt.s32.totalorder %v452, 0
    %v454 = vsel %vm453, %v452, 0
    %v455 = vshrl.u32 %v454, 5
    %v456 = vand.u32 %v454, 31
    %v457 = vsub.s32 32, %v456
    %v458 = vshrl.u32 683565275, %v457
    %v459 = vshll.u32 683565275, %v456
    %v460 = vshrl.u32 2475754826, %v457
    %v461 = vor.u32 %v459, %v460
    %v462 = vshll.u32 2475754826, %v456
    %v463 = vshrl.u32 2131351028, %v457
    %v464 = vor.u32 %v462, %v463
    %v465 = vshll.u32 2131351028, %v456
    %v466 = vshrl.u32 2102212464, %v457
    %v467 = vor.u32 %v465, %v466
    %v468 = vshll.u32 2102212464, %v456
    %v469 = vshrl.u32 920167782, %v457
    %v470 = vor.u32 %v468, %v469
    %v471 = vshll.u32 920167782, %v456
    %v472 = vshrl.u32 1326507024, %v457
    %v473 = vor.u32 %v471, %v472
    %vm474 = vcmp.lt.s32.totalorder %v455, 1
    %vm475 = vcmp.lt.s32.totalorder %v455, 2
    %vm476 = vcmp.lt.s32.totalorder %v455, 3
    %vm477 = vcmp.lt.s32.totalorder %v455, 4
    %v478 = vsel %vm474, %v458, %v461
    %v479 = vsel %vm477, %v467, 2102212464
    %v480 = vsel %vm476, %v464, %v479
    %v481 = vsel %vm475, %v478, %v480
    %v482 = vsel %vm474, %v461, %v464
    %v483 = vsel %vm477, %v470, 920167782
    %v484 = vsel %vm476, %v467, %v483
    %v485 = vsel %vm475, %v482, %v484
    %v486 = vsel %vm474, %v464, %v467
    %v487 = vsel %vm477, %v473, 1326507024
    %v488 = vsel %vm476, %v470, %v487
    %v489 = vsel %vm475, %v486, %v488
    %v490 = vshll.u32 %v450, 8
    %v491 = vmul.u32.u64.compose %v490, %v489
    %v492 = vextract.low.u32 %v491
    %v493 = vextract.high.u32 %v491
    %v494 = vmul.u32.u64.compose %v490, %v485
    %v495 = vextract.low.u32 %v494
    %v496 = vextract.high.u32 %v494
    %v497 = vmul.u32 %v490, %v481
    %v498 = vadd.s32 %v493, %v495
    %vm499 = vc.u32 %v493, %v495
    %v500 = vadd.s32 %v496, 1
    %v501 = vsel %vm499, %v500, %v496
    %v502 = vadd.s32 %v497, %v501
    %v503 = vadd.s32 %v502, 536870912
    %v504 = vshrl.u32 %v503, 30
    %v505 = vshll.u32 %v504, 30
    %v506 = vsub.s32 %v502, %v505
    %vm507 = vcmp.lt.s32.totalorder %v506, 0
    %v508 = vsub.s32 0, %v506
    %v509 = vsel %vm507, %v508, %v506
    %v510 = vclz %v509
    %v511 = vsub.s32 %v510, 2
    %vm512 = vcmp.gt.s32.totalorder 0, %v511
    %v513 = vsel %vm512, 0, %v511
    %v514 = vsub.s32 32, %v513
    %v515 = vshll.u32 %v506, %v513
    %v516 = vshrl.u32 %v498, %v514
    %v517 = vor.u32 %v515, %v516
    %v518 = vsub.s32 4294967266, %v513
    %v519 = vadd.s32 %v518, 127
    %v520 = vshll.u32 %v519, 23
    %v521 = vor.u32 4788187, %v520
    %v522 = vand.u32 2147483647, %v521
    %v524 = vcvt.s32.f32 %v517
    %v525 = vmul.f32 %v524, %v522
    %v526 = vxor.u32 %v525, 2147483648
    %v527 = vsel %vm444, %v526, %v525
    %v528 = vsub.s32 4, %v504
    %v529 = vsel %vm444, %v528, %v504
    %v530 = vsel %vm443, %v129, %v527
    %v531 = vsel %vm443, 0, %v529
    %v532 = vcosq.f32.pop %v530
    %v533 = vsinq.f32.pop %v530
    %vm534 = vweird.f32 %v129
    %v535 = vadd.s32 %v531, 3
    %v536 = vand.u32 %v535, 3
    %vm537 = vcmp.lt.s32.totalorder %v536, 2
    %vm538 = vcmp.eq.s32.totalorder %v536, 0
    %v539 = vxor.u32 %v533, 2147483648
    %v540 = vsel %vm538, %v532, %v539
    %vm541 = vcmp.eq.s32.totalorder %v536, 2
    %v542 = vxor.u32 %v532, 2147483648
    %v543 = vsel %vm541, %v542, %v533
    %v544 = vsel %vm537, %v540, %v543
    %v545 = vsel %vm534, nan, %v544
    %546 = vst [vmem:[#allocation7] sm:$0xff] %v233
    %547 = vst [vmem:[#allocation7 + $0x8] sm:$0xff] %v337
    %548 = vst [vmem:[#allocation7 + $0x10] sm:$0xff] %v441
    %549 = vst [vmem:[#allocation7 + $0x18] sm:$0xff] %v545
    // Predicated region
    $region22: #{tpu_custom_call.1} parent=1 // pred_check
      _
    $region23: #{tpu_custom_call.1} parent=1 // pred_check_branch
      %551 = sbr.rel (0) target = $region25
    $region24: #{tpu_custom_call.1} parent=1 // pred_region
      %s553 = ssub.s32 512, 512
      %554 = vsyncadd [#allocation4], %s553
      %s556 = sshll.u32 [#allocation7], 4
      %s557 = int_to_ptr.vmem [resolvable:$true] %s556
      %559 = dma.vmem_to_hbm [thread:$0]  %s557, 512, %s3, [#allocation4]
    $region25: #{tpu_custom_call.1} parent=1 // pred_fallthru
      _
    // Predicated region
    $region26: #{tpu_custom_call.1} parent=1 // pred_check
      _
    $region27: #{tpu_custom_call.1} parent=1 // pred_check_branch
      %561 = sbr.rel (0) target = $region29
    $region28: #{tpu_custom_call.1} parent=1 // pred_region
      %562 = dma.done [#allocation4], 512
    $region29: #{tpu_custom_call.1} parent=1 // pred_fallthru
      _
    %563 = vsyncpa [#allocation3], 1
    %564 = vsyncpa [#allocation6], 1
    %565 = vsyncpa [#allocation4], 1

</llo_original>
